<compile_context>
chip_gen: v7x
topology: tpu7x:2x2x1
jax: 0.10.0
libtpu: 0.0.40
codegen_flags: <defaults>
</compile_context>

<pallas_src>
import functools

import jax
import jax.numpy as jnp
from jax import lax
from jax.experimental import pallas as pl
from jax.experimental.pallas import tpu as pltpu


def _round_up(x, m):
    return (x + m - 1) // m * m


def _cdiv(x, m):
    return (x + m - 1) // m


def _nce_softmax_loss_kernel(x_ref, o_ref, *, true_b, tb):
    """One batch tile: per-row softmax cross-entropy with target class 0,
    reduced to a single per-tile partial sum.

    x_ref: (TB, N) logits (storage dtype, upcast here)          -- VMEM
    o_ref: (8, 128) f32 slab; partial sum at [0, 0], zeros else -- VMEM
    """
    x = x_ref[...].astype(jnp.float32)                                   # (TB, N)
    # numerically-stable logsumexp along the class (lane) axis
    m = jnp.max(x, axis=-1, keepdims=True)                               # (TB, 1)
    lse = m + jnp.log(jnp.sum(jnp.exp(x - m), axis=-1, keepdims=True))   # (TB, 1)
    per_row = lse - x[:, 0:1]                                            # target class 0

    # Mask batch-padding rows (global row index >= true batch size).  The
    # ragged edge block contains unspecified values; this select keeps them
    # (including any NaN/inf they produce) out of the partial sum.
    row = pl.program_id(0) * tb + lax.broadcasted_iota(jnp.int32, (tb, 1), 0)
    per_row = jnp.where(row < true_b, per_row, 0.0)

    partial = jnp.sum(per_row)                                           # scalar
    # Lane-dense, fully (8,128)-aligned output slab: partial at [0,0], 0 else.
    r = lax.broadcasted_iota(jnp.int32, (8, 128), 0)
    c = lax.broadcasted_iota(jnp.int32, (8, 128), 1)
    o_ref[...] = jnp.where((r == 0) & (c == 0), partial, jnp.float32(0.0))


def nce_softmax_loss(x, *, vmem_working_budget_bytes=24 * 1024 * 1024):
    """Info-NCE loss. x: (bsz, N) or (bsz, N, 1) logits, any float dtype.

    Returns a scalar float32 loss (mean over the batch).
    """
    B = x.shape[0]
    # torch's x.squeeze() on (bsz, N, 1) -> (bsz, N); reshape keeps the batch
    # dim even when bsz == 1 (jnp.squeeze would silently drop it).
    x2d = x.reshape(B, -1)
    N = x2d.shape[1]
    itemsize = jnp.dtype(x2d.dtype).itemsize

    # Sublane pack of the storage dtype: 8 rows (f32), 16 (bf16), 32 (int8/fp8).
    pack = {1: 32, 2: 16}.get(itemsize, 8)

    # Per-row VMEM bytes: two double-buffered DMA copies of the storage-dtype
    # tile + the in-kernel f32 upcast + the exp(x - m) f32 temporary.
    bytes_per_row = N * (2 * itemsize + 2 * 4)

    tb = (vmem_working_budget_bytes // bytes_per_row) // pack * pack
    tb = max(pack, min(tb, 1024))          # cap: 512-1024-row tiles ~= HBM roofline
    # Keep >= ~4 grid steps when the batch allows it (pipelining + v7x 2-TC split).
    tb = min(tb, _round_up(_cdiv(B, 4), pack))
    tb = max(pack, tb)
    num_blocks = _cdiv(B, tb)              # no jnp.pad: ragged edge handled in-kernel

    tile_vmem = tb * bytes_per_row + 2 * 8 * 128 * 4     # inputs + temps + out bufs
    vmem_limit = int(min(48 * 1024 * 1024,
                         max(16 * 1024 * 1024, tile_vmem + 8 * 1024 * 1024)))

    kernel = functools.partial(_nce_softmax_loss_kernel, true_b=B, tb=tb)

    partials = pl.pallas_call(
        kernel,
        out_shape=jax.ShapeDtypeStruct((num_blocks * 8, 128), jnp.float32),
        grid=(num_blocks,),
        in_specs=[pl.BlockSpec((tb, N), lambda i: (i, 0))],
        out_specs=pl.BlockSpec((8, 128), lambda i: (i, 0)),
        compiler_params=pltpu.CompilerParams(
            dimension_semantics=("parallel",),
            vmem_limit_bytes=vmem_limit,
        ),
        cost_estimate=pl.CostEstimate(
            flops=3 * B * N,                # max, subtract, sum (per element)
            transcendentals=B * N,          # exp
            bytes_accessed=B * N * itemsize + num_blocks * 8 * 128 * 4,
        ),
    )(x2d)

    # Tiny epilogue reduction over num_blocks partial sums in plain XLA;
    # divide by the TRUE batch size (edge rows were zeroed in-kernel).
    return jnp.sum(partials) / B


def _reference_loss(x):
    B = x.shape[0]
    x2d = x.reshape(B, -1).astype(jnp.float32)
    lse = jax.scipy.special.logsumexp(x2d, axis=-1)
    return jnp.mean(lse - x2d[:, 0])


if __name__ == "__main__":
    key = jax.random.PRNGKey(0)

    # contrastive score tensor as produced upstream of NCESoftmaxLoss: (bsz, K+1, 1)
    bsz, n_neg_plus_one = 8, 128
    x = jax.random.normal(key, (bsz, n_neg_plus_one, 1), dtype=jnp.float32)
    loss = nce_softmax_loss(x)
    jax.block_until_ready(loss)
    ref = _reference_loss(x)
    assert jnp.allclose(loss, ref, atol=1e-5, rtol=1e-5), (loss, ref)

    # ragged batch (B not a multiple of the tile) + bf16 storage path
    key2 = jax.random.PRNGKey(1)
    x2 = jax.random.normal(key2, (10, 96, 1), dtype=jnp.bfloat16)
    loss2 = nce_softmax_loss(x2)
    jax.block_until_ready(loss2)
    ref2 = _reference_loss(x2)
    assert jnp.allclose(loss2, ref2, atol=1e-3, rtol=1e-3), (loss2, ref2)

    print("KERNEL_OK")
</pallas_src>

<mosaic_0001>
module attributes {stable_mosaic.version = 11 : i64} {
  func.func @_nce_softmax_loss_kernel(%arg0: i32, %arg1: memref<8x128xf32, #tpu.memory_space<vmem>>, %arg2: memref<8x128xf32, #tpu.memory_space<vmem>>) attributes {dimension_semantics = [#tpu.dimension_semantics<parallel>], iteration_bounds = array<i64: 1>, scalar_prefetch = 0 : i64, scratch_operands = 0 : i64, tpu.core_type = #tpu.core_type<tc>, window_params = [{transform_indices = @transform_0, window_bounds = array<i64: 8, 128>}, {transform_indices = @transform_1, window_bounds = array<i64: 8, 128>}]} {
    %c0 = arith.constant 0 : index
    %c0_0 = arith.constant 0 : index
    %0 = vector.load %arg1[%c0, %c0_0] : memref<8x128xf32, #tpu.memory_space<vmem>>, vector<8x128xf32>
    %cst = arith.constant dense<0xFF800000> : vector<8xf32>
    %1 = vector.multi_reduction <maximumf>, %0, %cst [1] : vector<8x128xf32> to vector<8xf32>
    %2 = vector.shape_cast %1 : vector<8xf32> to vector<8x1xf32>
    %3 = vector.broadcast %2 : vector<8x1xf32> to vector<8x128xf32>
    %4 = arith.subf %0, %3 : vector<8x128xf32>
    %5 = math.exp %4 : vector<8x128xf32>
    %cst_1 = arith.constant dense<0.000000e+00> : vector<8xf32>
    %6 = vector.multi_reduction <add>, %5, %cst_1 [1] : vector<8x128xf32> to vector<8xf32>
    %7 = vector.shape_cast %6 : vector<8xf32> to vector<8x1xf32>
    %8 = math.log %7 : vector<8x1xf32>
    %9 = arith.addf %2, %8 : vector<8x1xf32>
    %10 = vector.extract_strided_slice %0 {offsets = [0, 0], sizes = [8, 1], strides = [1, 1]} : vector<8x128xf32> to vector<8x1xf32>
    %11 = arith.subf %9, %10 : vector<8x1xf32>
    %c8_i32 = arith.constant 8 : i32
    %12 = arith.muli %arg0, %c8_i32 : i32
    %13 = tpu.iota {dimensions = array<i32: 0>} : vector<8x1xi32>
    %14 = vector.broadcast %12 : i32 to vector<8x1xi32>
    %15 = arith.addi %14, %13 : vector<8x1xi32>
    %c8_i32_2 = arith.constant 8 : i32
    %16 = vector.broadcast %c8_i32_2 : i32 to vector<8x1xi32>
    %17 = arith.cmpi slt, %15, %16 : vector<8x1xi32>
    %cst_3 = arith.constant 0.000000e+00 : f32
    %18 = vector.broadcast %cst_3 : f32 to vector<8x1xf32>
    %19 = arith.select %17, %11, %18 : vector<8x1xi1>, vector<8x1xf32>
    %20 = vector.shape_cast %19 : vector<8x1xf32> to vector<1x8x1xf32>
    %cst_4 = arith.constant dense<0.000000e+00> : vector<1xf32>
    %21 = vector.multi_reduction <add>, %20, %cst_4 [1, 2] : vector<1x8x1xf32> to vector<1xf32>
    %22 = vector.shape_cast %21 : vector<1xf32> to vector<1x1x1xf32>
    %23 = vector.extract %22[0, 0, 0] : f32 from vector<1x1x1xf32>
    %24 = tpu.iota {dimensions = array<i32: 0>} : vector<8x128xi32>
    %25 = tpu.iota {dimensions = array<i32: 1>} : vector<8x128xi32>
    %c0_i32 = arith.constant 0 : i32
    %26 = vector.broadcast %c0_i32 : i32 to vector<8x128xi32>
    %27 = arith.cmpi eq, %24, %26 : vector<8x128xi32>
    %c0_i32_5 = arith.constant 0 : i32
    %28 = vector.broadcast %c0_i32_5 : i32 to vector<8x128xi32>
    %29 = arith.cmpi eq, %25, %28 : vector<8x128xi32>
    %30 = arith.andi %27, %29 : vector<8x128xi1>
    %cst_6 = arith.constant 0.000000e+00 : f32
    %31 = vector.broadcast %23 : f32 to vector<8x128xf32>
    %32 = vector.broadcast %cst_6 : f32 to vector<8x128xf32>
    %33 = arith.select %30, %31, %32 : vector<8x128xi1>, vector<8x128xf32>
    %c0_7 = arith.constant 0 : index
    %c0_8 = arith.constant 0 : index
    %34 = vector.load %arg2[%c0_7, %c0_8] : memref<8x128xf32, #tpu.memory_space<vmem>>, vector<8x128xf32>
    tpu.vector_store %arg2[%c0_7, %c0_8], %33 {strides = array<i32>} : memref<8x128xf32, #tpu.memory_space<vmem>>, vector<8x128xf32>,
    return
  }
  func.func @transform_0(%arg0: i32) -> (i32, i32) {
    %c0_i32 = arith.constant 0 : i32
    %c0_i32_0 = arith.constant 0 : i32
    return %arg0, %c0_i32 : i32, i32
  }
  func.func @transform_1(%arg0: i32) -> (i32, i32) {
    %c0_i32 = arith.constant 0 : i32
    %c0_i32_0 = arith.constant 0 : i32
    return %arg0, %c0_i32 : i32, i32
  }
}

</mosaic_0001>

<llo_original>
// kernel: tpu_custom_call.1
$region0: #{tpu_custom_call.1}
  #allocation0 [shape = 'u32[]', space=smem, size = 0x4, offset = 0x4, fixed_abs, tag = 'smem constant byte address 0x4 - core index']
  #allocation1 [shape = 'u32[144,128]{1,0:T(1,128)}', space=vmem, size = 0x12000, scoped, tag = 'internal scratch']
  %s0 = inlined_call_operand.hbm [shape: f32[8,128], index: 0, kind: input, shape index: {}]
  %s1 = inlined_call_operand.hbm [shape: f32[8,128], index: 1, kind: output, shape index: {}]
  %s2 = sld [smem:[#allocation0]]
  $region18: #{tpu_custom_call.1} parent=0
    _
  %s4 = ssub.s32 1, %s2
  %s5 = scalar_select 0, %s4, %s2
  $region1: #{tpu_custom_call.1} parent=0
    #allocation2 [shape = 'u8[4096]{0}', space=vmem, size = 0x1000, scoped, tag = 'input window, operand 0, single buffered']
    #allocation3 [shape = 's32[1]{0}', space=sflag, size = 0x4, scoped, tag = 'scoped memory for tpu_custom_call.1']
    #allocation4 [shape = 's32[1]{0}', space=sflag, size = 0x4, scoped, tag = 'scoped memory for tpu_custom_call.1']
    #allocation5 [shape = 'u8[4096]{0}', space=vmem, size = 0x1000, scoped, tag = 'output window, operand 0, single buffered']
    %6 = vsyncpa [#allocation3], 0
    %7 = vsyncpa [#allocation4], 0
    // Predicated region
    $region2: #{tpu_custom_call.1} parent=1 // pred_check
      _
    $region3: #{tpu_custom_call.1} parent=1 // pred_check_branch
      %9 = sbr.rel (0) target = $region5
    $region4: #{tpu_custom_call.1} parent=1 // pred_region
      %s11 = ssub.s32 128, 128
      %12 = vsyncadd [#allocation3], %s11
      %s14 = sshll.u32 [#allocation2], 4
      %s15 = int_to_ptr.vmem [resolvable:$true] %s14
      %17 = dma.hbm_to_vmem [thread:$0]  %s0, 128, %s15, [#allocation3]
    $region5: #{tpu_custom_call.1} parent=1 // pred_fallthru
      _
    // Predicated region
    $region6: #{tpu_custom_call.1} parent=1 // pred_check
      _
    $region7: #{tpu_custom_call.1} parent=1 // pred_check_branch
      %19 = sbr.rel (0) target = $region9
    $region8: #{tpu_custom_call.1} parent=1 // pred_region
      %20 = dma.done [#allocation3], 128
    $region9: #{tpu_custom_call.1} parent=1 // pred_fallthru
      _
    %v21 = vld [vmem:[#allocation2] sm:$0xff]
    %22 = vmax.xlane.f32.xlu0 %v21
    %v23 = vpop.xlane.xlu0 %22
    %v24 = vsub.f32 %v21, %v23
    %v25 = vmul.f32 %v24, 1.442695
    %v26 = vpow.pop %v25
    %27 = vadd.xlane.f32.xlu0 %v26
    %v28 = vpop.xlane.xlu0 %27
    %v29 = vlog2.pop %v28
    %v30 = vmul.f32 %v29, 0.6931472
    %v31 = vadd.f32 %v23, %v30
    %v32 = vsub.f32 %v31, %v21
    %s33 = smul.u32 0, 8
    %v34 = vlaneseq
    %v35 = vshrl.u32 %v34, 7
    %v36 = vstv %s33
    %v37 = vadd.s32 %v36, %v35
    %vm38 = vcmp.lt.s32.totalorder %v37, 8
    %v39 = vsel %vm38, %v32, 0.0
    %vm40 = vcmask 7168
    %v41 = vsel %vm40, %v39, 0.0
    %42 = vadd.xlane.f32.xlu0 %v41
    %v43 = vpop.xlane.xlu0 %42
    %v44 = vrot.slane %v43, 4
    %v45 = vadd.f32 %v43, %v44
    %v46 = vrot.slane %v45, 2
    %v47 = vadd.f32 %v45, %v46
    %v48 = vrot.slane %v47, 1
    %v49 = vadd.f32 %v47, %v48
    %s50 = vtos %v49
    %v51 = vlaneseq
    %v52 = vand.u32 %v51, 127
    %vm53 = vcmp.eq.s32.totalorder %v35, 0
    %vm54 = vcmp.eq.s32.totalorder %v52, 0
    %vm55 = vmand %vm53, %vm54
    %v56 = vstv %s50
    %v57 = vsel %vm55, %v56, 0.0
    %58 = vst [vmem:[#allocation5] sm:$0xff] %v57
    // Predicated region
    $region10: #{tpu_custom_call.1} parent=1 // pred_check
      _
    $region11: #{tpu_custom_call.1} parent=1 // pred_check_branch
      %60 = sbr.rel (0) target = $region13
    $region12: #{tpu_custom_call.1} parent=1 // pred_region
      %s62 = ssub.s32 128, 128
      %63 = vsyncadd [#allocation4], %s62
      %s65 = sshll.u32 [#allocation5], 4
      %s66 = int_to_ptr.vmem [resolvable:$true] %s65
      %68 = dma.vmem_to_hbm [thread:$0]  %s66, 128, %s1, [#allocation4]
    $region13: #{tpu_custom_call.1} parent=1 // pred_fallthru
      _
    // Predicated region
    $region14: #{tpu_custom_call.1} parent=1 // pred_check
      _
    $region15: #{tpu_custom_call.1} parent=1 // pred_check_branch
      %70 = sbr.rel (0) target = $region17
    $region16: #{tpu_custom_call.1} parent=1 // pred_region
      %71 = dma.done [#allocation4], 128
    $region17: #{tpu_custom_call.1} parent=1 // pred_fallthru
      _
    %72 = vsyncpa [#allocation3], 1
    %73 = vsyncpa [#allocation4], 1

</llo_original>
